<compile_context>
chip_gen: v7x
topology: tpu7x:2x2x1
jax: 0.10.0
libtpu: 0.0.40
codegen_flags: <defaults>
</compile_context>

<pallas_src>
import functools

import jax
import jax.numpy as jnp
from jax.experimental import pallas as pl
from jax.experimental.pallas import tpu as pltpu

MIN_DEPTH = 0.001
LANES = 128
SUBLANES = 8
MAX_TILE_ROWS = 8192          # 8192*128*4B = 4 MiB per input tile
CHUNK_ROWS = 512              # in-kernel accumulation chunk (256 KiB temporaries)
VMEM_LIMIT_BYTES = 32 * 1024 * 1024


def _num_core_splits() -> int:
    """2 grid splits only on v7x (2 TensorCores/chip); 1 elsewhere."""
    try:
        kind = jax.devices()[0].device_kind.lower()
    except Exception:
        return 1
    if "v7" in kind:
        # TODO(synk): verify the "parallel" leading axis really shards across
        # both v7x TensorCores in the trace; switch to pltpu.CORE_PARALLEL if not.
        return 2
    return 1


def _accum_tile(pred_ref, gt_ref, part_ref, *, tile_rows, chunk_rows,
                block_row0, num_rows, masked):
    """Fold one (tile_rows, 128) block into the resident (8,128) accumulators.

    Statically unrolled over `chunk_rows`-row chunks read straight from the
    input refs, so only chunk-sized temporaries live in VMEM/vregs.
    """
    s_acc = jnp.zeros((SUBLANES, LANES), jnp.float32)
    ss_acc = jnp.zeros((SUBLANES, LANES), jnp.float32)
    n_acc = jnp.zeros((SUBLANES, LANES), jnp.float32)

    r0 = 0
    while r0 < tile_rows:
        sz = min(chunk_rows, tile_rows - r0)          # always a multiple of 8
        pred = jnp.maximum(pred_ref[r0:r0 + sz, :].astype(jnp.float32), 1e-6)
        gt = gt_ref[r0:r0 + sz, :].astype(jnp.float32)

        m = gt > MIN_DEPTH
        if masked:
            # Rows past the logical end (partial last block, or a fully
            # duplicated clamped block of a second core split) are discarded.
            rid = jax.lax.broadcasted_iota(jnp.int32, (sz, LANES), 0)
            m = m & ((block_row0 + (r0 + rid)) < num_rows)

        # Select discards the unselected branch, so log(gt<=0) / garbage OOB
        # values never reach the accumulators.
        err = jnp.where(m, jnp.log(pred) - jnp.log(gt), 0.0)
        cnt = m.astype(jnp.float32)

        err3 = err.reshape(sz // SUBLANES, SUBLANES, LANES)
        cnt3 = cnt.reshape(sz // SUBLANES, SUBLANES, LANES)
        s_acc = s_acc + jnp.sum(err3, axis=0)
        ss_acc = ss_acc + jnp.sum(err3 * err3, axis=0)
        n_acc = n_acc + jnp.sum(cnt3, axis=0)
        r0 += sz

    part_ref[0, 0] += s_acc       # sum(err)
    part_ref[0, 1] += ss_acc      # sum(err^2)
    part_ref[0, 2] += n_acc       # count


def _silog_kernel(pred_ref, gt_ref, part_ref, *, tile_rows, chunk_rows, num_rows):
    c = pl.program_id(0)
    i = pl.program_id(1)

    @pl.when(i == 0)
    def _init():
        part_ref[...] = jnp.zeros_like(part_ref)

    lin_blk = c * pl.num_programs(1) + i
    block_row0 = lin_blk * tile_rows
    has_tail = block_row0 + tile_rows > num_rows

    # Cheap path for every interior block (no iota / bounds compare).
    @pl.when(jnp.logical_not(has_tail))
    def _interior():
        _accum_tile(pred_ref, gt_ref, part_ref, tile_rows=tile_rows,
                    chunk_rows=chunk_rows, block_row0=block_row0,
                    num_rows=num_rows, masked=False)

    # Boundary / duplicated blocks: mask rows >= num_rows.
    @pl.when(has_tail)
    def _boundary():
        _accum_tile(pred_ref, gt_ref, part_ref, tile_rows=tile_rows,
                    chunk_rows=chunk_rows, block_row0=block_row0,
                    num_rows=num_rows, masked=True)


def _masked_partials(pred, gt):
    """Tiny pure-JAX partial sums (used for <128-element tails / tiny inputs)."""
    pred = jnp.maximum(pred.astype(jnp.float32), 1e-6)
    gt = gt.astype(jnp.float32)
    m = gt > MIN_DEPTH
    err = jnp.where(m, jnp.log(pred) - jnp.log(jnp.where(m, gt, 1.0)), 0.0)
    return jnp.sum(err), jnp.sum(err * err), jnp.sum(m.astype(jnp.float32))


def silog_loss(prediction, gt):
    """Pallas TPU implementation of SILogLoss.forward(prediction, gt)."""
    assert prediction.shape == gt.shape
    total = prediction.size

    pred_flat = prediction.reshape(-1)
    gt_flat = gt.reshape(-1)

    rows = total // LANES
    rem = total - rows * LANES

    if rows < SUBLANES:
        # Fewer than 1024 elements: not worth a kernel launch.
        s, ss, n = _masked_partials(pred_flat, gt_flat)
        return jnp.sqrt(ss / n - 0.85 / (n * n) * (s * s)) * 10.0

    main = rows * LANES
    # Free reshape when total % 128 == 0 (the common case). When rem != 0 the
    # prefix slice costs one extra pass; the tiny tail is folded in pure JAX.
    pred2d = pred_flat[:main].reshape(rows, LANES)
    gt2d = gt_flat[:main].reshape(rows, LANES)

    tile_rows = min(MAX_TILE_ROWS, (rows // SUBLANES) * SUBLANES)
    num_row_blocks = pl.cdiv(rows, tile_rows)
    num_core_splits = _num_core_splits()
    blocks_per_core = pl.cdiv(num_row_blocks, num_core_splits)
    chunk_rows = min(CHUNK_ROWS, tile_rows)

    def in_index_map(c, i):
        # Clamp so a core split that runs past the last real block re-reads a
        # valid block; its contribution is fully masked out in the kernel.
        blk = jnp.minimum(c * blocks_per_core + i, num_row_blocks - 1)
        return (blk, 0)

    kernel = functools.partial(_silog_kernel, tile_rows=tile_rows,
                               chunk_rows=chunk_rows, num_rows=rows)

    in_bytes = int(jnp.dtype(prediction.dtype).itemsize)
    cost = pl.CostEstimate(
        flops=12 * main,
        transcendentals=2 * main,
        bytes_accessed=2 * main * in_bytes,
    )

    parts = pl.pallas_call(
        kernel,
        out_shape=jax.ShapeDtypeStruct(
            (num_core_splits, 3, SUBLANES, LANES), jnp.float32),
        grid_spec=pltpu.PrefetchScalarGridSpec(
            num_scalar_prefetch=0,
            grid=(num_core_splits, blocks_per_core),
            in_specs=[
                pl.BlockSpec((tile_rows, LANES), in_index_map),
                pl.BlockSpec((tile_rows, LANES), in_index_map),
            ],
            out_specs=pl.BlockSpec(
                (1, 3, SUBLANES, LANES), lambda c, i: (c, 0, 0, 0)),
        ),
        compiler_params=pltpu.CompilerParams(
            dimension_semantics=("parallel", "arbitrary"),
            vmem_limit_bytes=VMEM_LIMIT_BYTES,
        ),
        cost_estimate=cost,
    )(pred2d, gt2d)

    # Combine per-core (8,128) vector partials; finish in plain JAX.
    totals = jnp.sum(parts, axis=(0, 2, 3))      # (3,) = [sum, sum_sq, count]
    s, ss, n = totals[0], totals[1], totals[2]

    if rem:
        ts, tss, tn = _masked_partials(pred_flat[main:], gt_flat[main:])
        s, ss, n = s + ts, ss + tss, n + tn

    # NOTE: n == 0 (empty mask) yields NaN, matching the PyTorch reference.
    return jnp.sqrt(ss / n - 0.85 / (n * n) * (s * s)) * 10.0


def _silog_loss_ref(prediction, gt):
    """Pure-JAX reference with identical semantics (for sanity check)."""
    mask = gt > MIN_DEPTH
    pred = jnp.maximum(prediction, 1e-6)
    err = jnp.where(mask, jnp.log(pred) - jnp.log(jnp.where(mask, gt, 1.0)), 0.0)
    n = jnp.sum(mask.astype(jnp.float32))
    s = jnp.sum(err)
    ss = jnp.sum(err * err)
    return jnp.sqrt(ss / n - 0.85 / (n * n) * s * s) * 10.0


if __name__ == "__main__":
    key = jax.random.PRNGKey(0)
    k1, k2 = jax.random.split(key)

    B, C, H, W = 2, 4, 16, 16  # NCHW, small synthetic shapes
    prediction = jax.random.uniform(k1, (B, C, H, W), jnp.float32, 0.01, 10.0)
    gt = jax.random.uniform(k2, (B, C, H, W), jnp.float32, 0.0, 10.0)
    # force some invalid-depth pixels to exercise the mask
    gt = gt.at[0, 0, 0, :8].set(0.0)
    gt = gt.at[1, 2, 5, 10:].set(0.0)

    loss = jax.block_until_ready(silog_loss(prediction, gt))
    ref = jax.block_until_ready(_silog_loss_ref(prediction, gt))

    assert jnp.isfinite(loss), "loss is not finite"
    assert jnp.abs(loss - ref) <= 1e-3 * (1.0 + jnp.abs(ref)), (
        f"mismatch: kernel={loss} ref={ref}")
    print("KERNEL_OK")
</pallas_src>

<mosaic_0001>
module attributes {stable_mosaic.version = 11 : i64} {
  func.func @_silog_kernel(%arg0: i32, %arg1: i32, %arg2: memref<16x128xf32, #tpu.memory_space<vmem>>, %arg3: memref<16x128xf32, #tpu.memory_space<vmem>>, %arg4: memref<1x3x8x128xf32, #tpu.memory_space<vmem>>) attributes {dimension_semantics = [#tpu.dimension_semantics<parallel>, #tpu.dimension_semantics<arbitrary>], iteration_bounds = array<i64: 1, 1>, scalar_prefetch = 0 : i64, scratch_operands = 0 : i64, tpu.core_type = #tpu.core_type<tc>, window_params = [{transform_indices = @transform_0, window_bounds = array<i64: 16, 128>}, {transform_indices = @transform_1, window_bounds = array<i64: 16, 128>}, {transform_indices = @transform_2, window_bounds = array<i64: 1, 3, 8, 128>}]} {
    %c0_i32 = arith.constant 0 : i32
    %0 = arith.cmpi eq, %arg1, %c0_i32 : i32
    %1 = arith.extui %0 : i1 to i32
    %c0_i32_0 = arith.constant 0 : i32
    %2 = arith.cmpi ne, %1, %c0_i32_0 : i32
    scf.if %2 {
      %cst = arith.constant 0.000000e+00 : f32
      %13 = vector.broadcast %cst : f32 to vector<1x3x8x128xf32>
      %c0 = arith.constant 0 : index
      %c0_5 = arith.constant 0 : index
      %c0_6 = arith.constant 0 : index
      %c0_7 = arith.constant 0 : index
      %14 = vector.load %arg4[%c0, %c0_5, %c0_6, %c0_7] : memref<1x3x8x128xf32, #tpu.memory_space<vmem>>, vector<1x3x8x128xf32>
      tpu.vector_store %arg4[%c0, %c0_5, %c0_6, %c0_7], %13 {strides = array<i32>} : memref<1x3x8x128xf32, #tpu.memory_space<vmem>>, vector<1x3x8x128xf32>,
    } else {
    }
    %c1_i32 = arith.constant 1 : i32
    %3 = arith.muli %arg0, %c1_i32 : i32
    %4 = arith.addi %3, %arg1 : i32
    %c16_i32 = arith.constant 16 : i32
    %5 = arith.muli %4, %c16_i32 : i32
    %c16_i32_1 = arith.constant 16 : i32
    %6 = arith.addi %5, %c16_i32_1 : i32
    %c16_i32_2 = arith.constant 16 : i32
    %7 = arith.cmpi sgt, %6, %c16_i32_2 : i32
    %true = arith.constant true
    %8 = arith.xori %7, %true : i1
    %9 = arith.extui %8 : i1 to i32
    %c0_i32_3 = arith.constant 0 : i32
    %10 = arith.cmpi ne, %9, %c0_i32_3 : i32
    scf.if %10 {
      %cst = arith.constant 0.000000e+00 : f32
      %13 = vector.broadcast %cst : f32 to vector<8x128xf32>
      %cst_5 = arith.constant 0.000000e+00 : f32
      %14 = vector.broadcast %cst_5 : f32 to vector<8x128xf32>
      %cst_6 = arith.constant 0.000000e+00 : f32
      %15 = vector.broadcast %cst_6 : f32 to vector<8x128xf32>
      %c0 = arith.constant 0 : index
      %c0_7 = arith.constant 0 : index
      %16 = vector.load %arg2[%c0, %c0_7] : memref<16x128xf32, #tpu.memory_space<vmem>>, vector<16x128xf32>
      %cst_8 = arith.constant 9.99999997E-7 : f32
      %17 = vector.broadcast %cst_8 : f32 to vector<16x128xf32>
      %18 = arith.maximumf %16, %17 : vector<16x128xf32>
      %c0_9 = arith.constant 0 : index
      %c0_10 = arith.constant 0 : index
      %19 = vector.load %arg3[%c0_9, %c0_10] : memref<16x128xf32, #tpu.memory_space<vmem>>, vector<16x128xf32>
      %cst_11 = arith.constant 1.000000e-03 : f32
      %20 = vector.broadcast %cst_11 : f32 to vector<16x128xf32>
      %21 = arith.cmpf ogt, %19, %20 : vector<16x128xf32>
      %22 = math.log %18 : vector<16x128xf32>
      %23 = math.log %19 : vector<16x128xf32>
      %24 = arith.subf %22, %23 : vector<16x128xf32>
      %cst_12 = arith.constant 0.000000e+00 : f32
      %25 = vector.broadcast %cst_12 : f32 to vector<16x128xf32>
      %26 = arith.select %21, %24, %25 : vector<16x128xi1>, vector<16x128xf32>
      %27 = arith.extui %21 : vector<16x128xi1> to vector<16x128xi32>
      %28 = arith.sitofp %27 : vector<16x128xi32> to vector<16x128xf32>
      %29 = vector.shape_cast %26 : vector<16x128xf32> to vector<2x8x128xf32>
      %30 = vector.shape_cast %28 : vector<16x128xf32> to vector<2x8x128xf32>
      %cst_13 = arith.constant dense<0.000000e+00> : vector<8x128xf32>
      %31 = vector.multi_reduction <add>, %29, %cst_13 [0] : vector<2x8x128xf32> to vector<8x128xf32>
      %32 = arith.addf %13, %31 : vector<8x128xf32>
      %33 = arith.mulf %29, %29 : vector<2x8x128xf32>
      %cst_14 = arith.constant dense<0.000000e+00> : vector<8x128xf32>
      %34 = vector.multi_reduction <add>, %33, %cst_14 [0] : vector<2x8x128xf32> to vector<8x128xf32>
      %35 = arith.addf %14, %34 : vector<8x128xf32>
      %cst_15 = arith.constant dense<0.000000e+00> : vector<8x128xf32>
      %36 = vector.multi_reduction <add>, %30, %cst_15 [0] : vector<2x8x128xf32> to vector<8x128xf32>
      %37 = arith.addf %15, %36 : vector<8x128xf32>
      %c0_16 = arith.constant 0 : index
      %c0_17 = arith.constant 0 : index
      %c0_18 = arith.constant 0 : index
      %c0_19 = arith.constant 0 : index
      %38 = vector.load %arg4[%c0_16, %c0_17, %c0_18, %c0_19] : memref<1x3x8x128xf32, #tpu.memory_space<vmem>>, vector<1x1x8x128xf32>
      %39 = vector.shape_cast %38 : vector<1x1x8x128xf32> to vector<8x128xf32>
      %40 = arith.addf %39, %32 : vector<8x128xf32>
      %c0_20 = arith.constant 0 : index
      %c0_21 = arith.constant 0 : index
      %c0_22 = arith.constant 0 : index
      %c0_23 = arith.constant 0 : index
      %41 = vector.load %arg4[%c0_20, %c0_21, %c0_22, %c0_23] : memref<1x3x8x128xf32, #tpu.memory_space<vmem>>, vector<1x1x8x128xf32>
      %42 = vector.shape_cast %41 : vector<1x1x8x128xf32> to vector<8x128xf32>
      %43 = vector.shape_cast %40 : vector<8x128xf32> to vector<1x1x8x128xf32>
      tpu.vector_store %arg4[%c0_20, %c0_21, %c0_22, %c0_23], %43 {strides = array<i32>} : memref<1x3x8x128xf32, #tpu.memory_space<vmem>>, vector<1x1x8x128xf32>,
      %c0_24 = arith.constant 0 : index
      %c1 = arith.constant 1 : index
      %c0_25 = arith.constant 0 : index
      %c0_26 = arith.constant 0 : index
      %44 = vector.load %arg4[%c0_24, %c1, %c0_25, %c0_26] : memref<1x3x8x128xf32, #tpu.memory_space<vmem>>, vector<1x1x8x128xf32>
      %45 = vector.shape_cast %44 : vector<1x1x8x128xf32> to vector<8x128xf32>
      %46 = arith.addf %45, %35 : vector<8x128xf32>
      %c0_27 = arith.constant 0 : index
      %c1_28 = arith.constant 1 : index
      %c0_29 = arith.constant 0 : index
      %c0_30 = arith.constant 0 : index
      %47 = vector.load %arg4[%c0_27, %c1_28, %c0_29, %c0_30] : memref<1x3x8x128xf32, #tpu.memory_space<vmem>>, vector<1x1x8x128xf32>
      %48 = vector.shape_cast %47 : vector<1x1x8x128xf32> to vector<8x128xf32>
      %49 = vector.shape_cast %46 : vector<8x128xf32> to vector<1x1x8x128xf32>
      tpu.vector_store %arg4[%c0_27, %c1_28, %c0_29, %c0_30], %49 {strides = array<i32>} : memref<1x3x8x128xf32, #tpu.memory_space<vmem>>, vector<1x1x8x128xf32>,
      %c0_31 = arith.constant 0 : index
      %c2 = arith.constant 2 : index
      %c0_32 = arith.constant 0 : index
      %c0_33 = arith.constant 0 : index
      %50 = vector.load %arg4[%c0_31, %c2, %c0_32, %c0_33] : memref<1x3x8x128xf32, #tpu.memory_space<vmem>>, vector<1x1x8x128xf32>
      %51 = vector.shape_cast %50 : vector<1x1x8x128xf32> to vector<8x128xf32>
      %52 = arith.addf %51, %37 : vector<8x128xf32>
      %c0_34 = arith.constant 0 : index
      %c2_35 = arith.constant 2 : index
      %c0_36 = arith.constant 0 : index
      %c0_37 = arith.constant 0 : index
      %53 = vector.load %arg4[%c0_34, %c2_35, %c0_36, %c0_37] : memref<1x3x8x128xf32, #tpu.memory_space<vmem>>, vector<1x1x8x128xf32>
      %54 = vector.shape_cast %53 : vector<1x1x8x128xf32> to vector<8x128xf32>
      %55 = vector.shape_cast %52 : vector<8x128xf32> to vector<1x1x8x128xf32>
      tpu.vector_store %arg4[%c0_34, %c2_35, %c0_36, %c0_37], %55 {strides = array<i32>} : memref<1x3x8x128xf32, #tpu.memory_space<vmem>>, vector<1x1x8x128xf32>,
    } else {
    }
    %11 = arith.extui %7 : i1 to i32
    %c0_i32_4 = arith.constant 0 : i32
    %12 = arith.cmpi ne, %11, %c0_i32_4 : i32
    scf.if %12 {
      %cst = arith.constant 0.000000e+00 : f32
      %13 = vector.broadcast %cst : f32 to vector<8x128xf32>
      %cst_5 = arith.constant 0.000000e+00 : f32
      %14 = vector.broadcast %cst_5 : f32 to vector<8x128xf32>
      %cst_6 = arith.constant 0.000000e+00 : f32
      %15 = vector.broadcast %cst_6 : f32 to vector<8x128xf32>
      %c0 = arith.constant 0 : index
      %c0_7 = arith.constant 0 : index
      %16 = vector.load %arg2[%c0, %c0_7] : memref<16x128xf32, #tpu.memory_space<vmem>>, vector<16x128xf32>
      %cst_8 = arith.constant 9.99999997E-7 : f32
      %17 = vector.broadcast %cst_8 : f32 to vector<16x128xf32>
      %18 = arith.maximumf %16, %17 : vector<16x128xf32>
      %c0_9 = arith.constant 0 : index
      %c0_10 = arith.constant 0 : index
      %19 = vector.load %arg3[%c0_9, %c0_10] : memref<16x128xf32, #tpu.memory_space<vmem>>, vector<16x128xf32>
      %cst_11 = arith.constant 1.000000e-03 : f32
      %20 = vector.broadcast %cst_11 : f32 to vector<16x128xf32>
      %21 = arith.cmpf ogt, %19, %20 : vector<16x128xf32>
      %22 = tpu.iota {dimensions = array<i32: 0>} : vector<16x128xi32>
      %c0_i32_12 = arith.constant 0 : i32
      %23 = vector.broadcast %c0_i32_12 : i32 to vector<16x128xi32>
      %24 = arith.addi %23, %22 : vector<16x128xi32>
      %25 = vector.broadcast %5 : i32 to vector<16x128xi32>
      %26 = arith.addi %25, %24 : vector<16x128xi32>
      %c16_i32_13 = arith.constant 16 : i32
      %27 = vector.broadcast %c16_i32_13 : i32 to vector<16x128xi32>
      %28 = arith.cmpi slt, %26, %27 : vector<16x128xi32>
      %29 = arith.andi %21, %28 : vector<16x128xi1>
      %30 = math.log %18 : vector<16x128xf32>
      %31 = math.log %19 : vector<16x128xf32>
      %32 = arith.subf %30, %31 : vector<16x128xf32>
      %cst_14 = arith.constant 0.000000e+00 : f32
      %33 = vector.broadcast %cst_14 : f32 to vector<16x128xf32>
      %34 = arith.select %29, %32, %33 : vector<16x128xi1>, vector<16x128xf32>
      %35 = arith.extui %29 : vector<16x128xi1> to vector<16x128xi32>
      %36 = arith.sitofp %35 : vector<16x128xi32> to vector<16x128xf32>
      %37 = vector.shape_cast %34 : vector<16x128xf32> to vector<2x8x128xf32>
      %38 = vector.shape_cast %36 : vector<16x128xf32> to vector<2x8x128xf32>
      %cst_15 = arith.constant dense<0.000000e+00> : vector<8x128xf32>
      %39 = vector.multi_reduction <add>, %37, %cst_15 [0] : vector<2x8x128xf32> to vector<8x128xf32>
      %40 = arith.addf %13, %39 : vector<8x128xf32>
      %41 = arith.mulf %37, %37 : vector<2x8x128xf32>
      %cst_16 = arith.constant dense<0.000000e+00> : vector<8x128xf32>
      %42 = vector.multi_reduction <add>, %41, %cst_16 [0] : vector<2x8x128xf32> to vector<8x128xf32>
      %43 = arith.addf %14, %42 : vector<8x128xf32>
      %cst_17 = arith.constant dense<0.000000e+00> : vector<8x128xf32>
      %44 = vector.multi_reduction <add>, %38, %cst_17 [0] : vector<2x8x128xf32> to vector<8x128xf32>
      %45 = arith.addf %15, %44 : vector<8x128xf32>
      %c0_18 = arith.constant 0 : index
      %c0_19 = arith.constant 0 : index
      %c0_20 = arith.constant 0 : index
      %c0_21 = arith.constant 0 : index
      %46 = vector.load %arg4[%c0_18, %c0_19, %c0_20, %c0_21] : memref<1x3x8x128xf32, #tpu.memory_space<vmem>>, vector<1x1x8x128xf32>
      %47 = vector.shape_cast %46 : vector<1x1x8x128xf32> to vector<8x128xf32>
      %48 = arith.addf %47, %40 : vector<8x128xf32>
      %c0_22 = arith.constant 0 : index
      %c0_23 = arith.constant 0 : index
      %c0_24 = arith.constant 0 : index
      %c0_25 = arith.constant 0 : index
      %49 = vector.load %arg4[%c0_22, %c0_23, %c0_24, %c0_25] : memref<1x3x8x128xf32, #tpu.memory_space<vmem>>, vector<1x1x8x128xf32>
      %50 = vector.shape_cast %49 : vector<1x1x8x128xf32> to vector<8x128xf32>
      %51 = vector.shape_cast %48 : vector<8x128xf32> to vector<1x1x8x128xf32>
      tpu.vector_store %arg4[%c0_22, %c0_23, %c0_24, %c0_25], %51 {strides = array<i32>} : memref<1x3x8x128xf32, #tpu.memory_space<vmem>>, vector<1x1x8x128xf32>,
      %c0_26 = arith.constant 0 : index
      %c1 = arith.constant 1 : index
      %c0_27 = arith.constant 0 : index
      %c0_28 = arith.constant 0 : index
      %52 = vector.load %arg4[%c0_26, %c1, %c0_27, %c0_28] : memref<1x3x8x128xf32, #tpu.memory_space<vmem>>, vector<1x1x8x128xf32>
      %53 = vector.shape_cast %52 : vector<1x1x8x128xf32> to vector<8x128xf32>
      %54 = arith.addf %53, %43 : vector<8x128xf32>
      %c0_29 = arith.constant 0 : index
      %c1_30 = arith.constant 1 : index
      %c0_31 = arith.constant 0 : index
      %c0_32 = arith.constant 0 : index
      %55 = vector.load %arg4[%c0_29, %c1_30, %c0_31, %c0_32] : memref<1x3x8x128xf32, #tpu.memory_space<vmem>>, vector<1x1x8x128xf32>
      %56 = vector.shape_cast %55 : vector<1x1x8x128xf32> to vector<8x128xf32>
      %57 = vector.shape_cast %54 : vector<8x128xf32> to vector<1x1x8x128xf32>
      tpu.vector_store %arg4[%c0_29, %c1_30, %c0_31, %c0_32], %57 {strides = array<i32>} : memref<1x3x8x128xf32, #tpu.memory_space<vmem>>, vector<1x1x8x128xf32>,
      %c0_33 = arith.constant 0 : index
      %c2 = arith.constant 2 : index
      %c0_34 = arith.constant 0 : index
      %c0_35 = arith.constant 0 : index
      %58 = vector.load %arg4[%c0_33, %c2, %c0_34, %c0_35] : memref<1x3x8x128xf32, #tpu.memory_space<vmem>>, vector<1x1x8x128xf32>
      %59 = vector.shape_cast %58 : vector<1x1x8x128xf32> to vector<8x128xf32>
      %60 = arith.addf %59, %45 : vector<8x128xf32>
      %c0_36 = arith.constant 0 : index
      %c2_37 = arith.constant 2 : index
      %c0_38 = arith.constant 0 : index
      %c0_39 = arith.constant 0 : index
      %61 = vector.load %arg4[%c0_36, %c2_37, %c0_38, %c0_39] : memref<1x3x8x128xf32, #tpu.memory_space<vmem>>, vector<1x1x8x128xf32>
      %62 = vector.shape_cast %61 : vector<1x1x8x128xf32> to vector<8x128xf32>
      %63 = vector.shape_cast %60 : vector<8x128xf32> to vector<1x1x8x128xf32>
      tpu.vector_store %arg4[%c0_36, %c2_37, %c0_38, %c0_39], %63 {strides = array<i32>} : memref<1x3x8x128xf32, #tpu.memory_space<vmem>>, vector<1x1x8x128xf32>,
    } else {
    }
    return
  }
  func.func @transform_0(%arg0: i32, %arg1: i32) -> (i32, i32) {
    %c1_i32 = arith.constant 1 : i32
    %0 = arith.muli %arg0, %c1_i32 : i32
    %1 = arith.addi %0, %arg1 : i32
    %c0_i32 = arith.constant 0 : i32
    %2 = arith.minsi %1, %c0_i32 : i32
    %c0_i32_0 = arith.constant 0 : i32
    %c0_i32_1 = arith.constant 0 : i32
    return %2, %c0_i32_0 : i32, i32
  }
  func.func @transform_1(%arg0: i32, %arg1: i32) -> (i32, i32) {
    %c1_i32 = arith.constant 1 : i32
    %0 = arith.muli %arg0, %c1_i32 : i32
    %1 = arith.addi %0, %arg1 : i32
    %c0_i32 = arith.constant 0 : i32
    %2 = arith.minsi %1, %c0_i32 : i32
    %c0_i32_0 = arith.constant 0 : i32
    %c0_i32_1 = arith.constant 0 : i32
    return %2, %c0_i32_0 : i32, i32
  }
  func.func @transform_2(%arg0: i32, %arg1: i32) -> (i32, i32, i32, i32) {
    %c0_i32 = arith.constant 0 : i32
    %c0_i32_0 = arith.constant 0 : i32
    %c0_i32_1 = arith.constant 0 : i32
    %c0_i32_2 = arith.constant 0 : i32
    return %arg0, %c0_i32, %c0_i32_0, %c0_i32_1 : i32, i32, i32, i32
  }
}

</mosaic_0001>

<llo_original>
// kernel: tpu_custom_call.1
$region0: #{tpu_custom_call.1}
  #allocation0 [shape = 'u32[]', space=smem, size = 0x4, offset = 0x4, fixed_abs, tag = 'smem constant byte address 0x4 - core index']
  #allocation1 [shape = 'u32[144,128]{1,0:T(1,128)}', space=vmem, size = 0x12000, scoped, tag = 'internal scratch']
  %s0 = inlined_call_operand.hbm [shape: f32[16,128], index: 0, kind: input, shape index: {}]
  %s1 = inlined_call_operand.hbm [shape: f32[16,128], index: 1, kind: input, shape index: {}]
  %s2 = inlined_call_operand.hbm [shape: f32[1,3,8,128], index: 2, kind: output, shape index: {}]
  %s3 = sld [smem:[#allocation0]]
  $region38: #{tpu_custom_call.1} parent=0
    _
  %s5 = ssub.s32 1, %s3
  %s6 = scalar_select 0, %s5, %s3
  $region1: #{tpu_custom_call.1} parent=0
    #allocation2 [shape = 'u8[8192]{0}', space=vmem, size = 0x2000, scoped, tag = 'input window, operand 0, single buffered']
    #allocation3 [shape = 's32[1]{0}', space=sflag, size = 0x4, scoped, tag = 'scoped memory for tpu_custom_call.1']
    #allocation4 [shape = 's32[1]{0}', space=sflag, size = 0x4, scoped, tag = 'scoped memory for tpu_custom_call.1']
    #allocation5 [shape = 'u8[8192]{0}', space=vmem, size = 0x2000, scoped, tag = 'input window, operand 1, single buffered']
    #allocation6 [shape = 's32[1]{0}', space=sflag, size = 0x4, scoped, tag = 'scoped memory for tpu_custom_call.1']
    #allocation7 [shape = 'u8[12288]{0}', space=vmem, size = 0x3000, scoped, tag = 'output window, operand 0, single buffered']
    %7 = vsyncpa [#allocation3], 0
    %8 = vsyncpa [#allocation6], 0
    %9 = vsyncpa [#allocation4], 0
    // Predicated region
    $region2: #{tpu_custom_call.1} parent=1 // pred_check
      _
    $region3: #{tpu_custom_call.1} parent=1 // pred_check_branch
      %11 = sbr.rel (0) target = $region5
    $region4: #{tpu_custom_call.1} parent=1 // pred_region
      %s12 = sadd.s32 0, 0
      %p13 = scmp.lt.s32.totalorder %s12, 0
      %s14 = scalar_select %p13, %s12, 0
      %s15 = smul.u32 2, %s14
      %s17 = ssub.s32 256, 256
      %18 = vsyncadd [#allocation3], %s17
      %s19 = smul.addr %s15, 128
      %s20 = scalar_lea.hbm %s0, %s19
      %s21 = sshll.u32 [#allocation2], 4
      %s22 = int_to_ptr.vmem [resolvable:$true] %s21
      %27 = dma.hbm_to_vmem [thread:$0]  %s20, 256, %s22, [#allocation3], 128, 128, 8
    $region5: #{tpu_custom_call.1} parent=1 // pred_fallthru
      _
    // Predicated region
    $region6: #{tpu_custom_call.1} parent=1 // pred_check
      _
    $region7: #{tpu_custom_call.1} parent=1 // pred_check_branch
      %29 = sbr.rel (0) target = $region9
    $region8: #{tpu_custom_call.1} parent=1 // pred_region
      %s30 = sadd.s32 0, 0
      %p31 = scmp.lt.s32.totalorder %s30, 0
      %s32 = scalar_select %p31, %s30, 0
      %s33 = smul.u32 2, %s32
      %s35 = ssub.s32 256, 256
      %36 = vsyncadd [#allocation6], %s35
      %s37 = smul.addr %s33, 128
      %s38 = scalar_lea.hbm %s1, %s37
      %s39 = sshll.u32 [#allocation5], 4
      %s40 = int_to_ptr.vmem [resolvable:$true] %s39
      %45 = dma.hbm_to_vmem [thread:$0]  %s38, 256, %s40, [#allocation6], 128, 128, 8
    $region9: #{tpu_custom_call.1} parent=1 // pred_fallthru
      _
    // Predicated region
    $region10: #{tpu_custom_call.1} parent=1 // pred_check
      _
    $region11: #{tpu_custom_call.1} parent=1 // pred_check_branch
      %47 = sbr.rel (0) target = $region13
    $region12: #{tpu_custom_call.1} parent=1 // pred_region
      %48 = dma.done [#allocation3], 256
    $region13: #{tpu_custom_call.1} parent=1 // pred_fallthru
      _
    // Predicated region
    $region14: #{tpu_custom_call.1} parent=1 // pred_check
      _
    $region15: #{tpu_custom_call.1} parent=1 // pred_check_branch
      %50 = sbr.rel (0) target = $region17
    $region16: #{tpu_custom_call.1} parent=1 // pred_region
      %51 = dma.done [#allocation6], 256
    $region17: #{tpu_custom_call.1} parent=1 // pred_fallthru
      _
    %s52 = sadd.s32 0, 0
    %p53 = scmp.lt.s32.totalorder %s52, 0
    %s54 = scalar_select %p53, %s52, 0
    %s55 = smul.u32 2, %s54
    %s56 = sadd.s32 0, 0
    %p57 = scmp.lt.s32.totalorder %s56, 0
    %s58 = scalar_select %p57, %s56, 0
    %s59 = smul.u32 2, %s58
    %p60 = scmp.eq.s32.totalorder 0, 0
    // Predicated region
    $region18: #{tpu_custom_call.1} parent=1 // pred_check
      %p61 = pneg %p60
    $region19: #{tpu_custom_call.1} parent=1 // pred_check_branch
      %63 = sbr.rel (%p61) target = $region21
    $region20: #{tpu_custom_call.1} parent=1 // pred_region
      %64 = vst [vmem:[#allocation7] sm:$0xff] 0.0
      %65 = vst [vmem:[#allocation7 + $0x8] sm:$0xff] 0.0
      %66 = vst [vmem:[#allocation7 + $0x10] sm:$0xff] 0.0
    $region21: #{tpu_custom_call.1} parent=1 // pred_fallthru
      _
    %s67 = sadd.s32 0, 0
    %s68 = smul.u32 %s67, 16
    %s69 = sadd.s32 %s68, 16
    %p70 = scmp.gt.s32.totalorder %s69, 16
    %p71 = scmp.le.s32.totalorder %s69, 16
    // Predicated region
    $region22: #{tpu_custom_call.1} parent=1 // pred_check
      %p72 = pneg %p71
    $region23: #{tpu_custom_call.1} parent=1 // pred_check_branch
      %74 = sbr.rel (%p72) target = $region25
    $region24: #{tpu_custom_call.1} parent=1 // pred_region
      %v75 = vld [vmem:[#allocation2] sm:$0xff]
      %v76 = vld [vmem:[#allocation2 + $0x8] sm:$0xff]
      %v77 = vmax.f32 %v75, 1e-06
      %v78 = vmax.f32 %v76, 1e-06
      %v79 = vld [vmem:[#allocation5] sm:$0xff]
      %v80 = vld [vmem:[#allocation5 + $0x8] sm:$0xff]
      %vm81 = vcmp.gt.f32.partialorder %v79, 0.001
      %vm82 = vcmp.gt.f32.partialorder %v80, 0.001
      %v83 = vlog2.pop %v77
      %v84 = vmul.f32 %v83, 0.6931472
      %v85 = vlog2.pop %v78
      %v86 = vmul.f32 %v85, 0.6931472
      %v87 = vlog2.pop %v79
      %v88 = vmul.f32 %v87, 0.6931472
      %v89 = vlog2.pop %v80
      %v90 = vmul.f32 %v89, 0.6931472
      %v91 = vsub.f32 %v84, %v88
      %v92 = vsub.f32 %v86, %v90
      %v93 = vsel %vm81, %v91, 0.0
      %v94 = vsel %vm82, %v92, 0.0
      %v95 = vsel %vm81, 1, 0
      %v96 = vsel %vm82, 1, 0
      %v97 = vcvt.s32.f32 %v95
      %v98 = vcvt.s32.f32 %v96
      %v99 = vadd.f32 %v93, %v94
      %v100 = vadd.f32 %v99, 0.0
      %v101 = vmul.f32 %v93, %v93
      %v102 = vmul.f32 %v94, %v94
      %v103 = vadd.f32 %v101, %v102
      %v104 = vadd.f32 %v103, 0.0
      %v105 = vadd.f32 %v97, %v98
      %v106 = vadd.f32 %v105, 0.0
      %v107 = vld [vmem:[#allocation7] sm:$0xff]
      %v108 = vadd.f32 %v107, %v100
      %109 = vst [vmem:[#allocation7] sm:$0xff] %v108
      %s110 = scalar_lea.vmem [#allocation7], 8
      %v111 = vld [vmem:[%s110] sm:$0xff]
      %v112 = vadd.f32 %v111, %v104
      %113 = vst [vmem:[%s110] sm:$0xff] %v112
      %s114 = scalar_lea.vmem [#allocation7], 16
      %v115 = vld [vmem:[%s114] sm:$0xff]
      %v116 = vadd.f32 %v115, %v106
      %117 = vst [vmem:[%s114] sm:$0xff] %v116
    $region25: #{tpu_custom_call.1} parent=1 // pred_fallthru
      _
    // Predicated region
    $region26: #{tpu_custom_call.1} parent=1 // pred_check
      %p118 = pneg %p70
    $region27: #{tpu_custom_call.1} parent=1 // pred_check_branch
      %120 = sbr.rel (%p118) target = $region29
    $region28: #{tpu_custom_call.1} parent=1 // pred_region
      %v121 = vld [vmem:[#allocation2] sm:$0xff]
      %v122 = vld [vmem:[#allocation2 + $0x8] sm:$0xff]
      %v123 = vmax.f32 %v121, 1e-06
      %v124 = vmax.f32 %v122, 1e-06
      %v125 = vld [vmem:[#allocation5] sm:$0xff]
      %v126 = vld [vmem:[#allocation5 + $0x8] sm:$0xff]
      %vm127 = vcmp.gt.f32.partialorder %v125, 0.001
      %vm128 = vcmp.gt.f32.partialorder %v126, 0.001
      %v129 = vlaneseq
      %v130 = vshrl.u32 %v129, 7
      %v131 = vadd.s32 %v130, 8
      %v132 = vstv %s68
      %v133 = vadd.s32 %v132, %v130
      %v134 = vadd.s32 %v132, %v131
      %vm135 = vcmp.lt.s32.totalorder %v133, 16
      %vm136 = vcmp.lt.s32.totalorder %v134, 16
      %vm137 = vmand %vm127, %vm135
      %vm138 = vmand %vm128, %vm136
      %v139 = vlog2.pop %v123
      %v140 = vmul.f32 %v139, 0.6931472
      %v141 = vlog2.pop %v124
      %v142 = vmul.f32 %v141, 0.6931472
      %v143 = vlog2.pop %v125
      %v144 = vmul.f32 %v143, 0.6931472
      %v145 = vlog2.pop %v126
      %v146 = vmul.f32 %v145, 0.6931472
      %v147 = vsub.f32 %v140, %v144
      %v148 = vsub.f32 %v142, %v146
      %v149 = vsel %vm137, %v147, 0.0
      %v150 = vsel %vm138, %v148, 0.0
      %v151 = vsel %vm137, 1, 0
      %v152 = vsel %vm138, 1, 0
      %v153 = vcvt.s32.f32 %v151
      %v154 = vcvt.s32.f32 %v152
      %v155 = vadd.f32 %v149, %v150
      %v156 = vadd.f32 %v155, 0.0
      %v157 = vmul.f32 %v149, %v149
      %v158 = vmul.f32 %v150, %v150
      %v159 = vadd.f32 %v157, %v158
      %v160 = vadd.f32 %v159, 0.0
      %v161 = vadd.f32 %v153, %v154
      %v162 = vadd.f32 %v161, 0.0
      %v163 = vld [vmem:[#allocation7] sm:$0xff]
      %v164 = vadd.f32 %v163, %v156
      %165 = vst [vmem:[#allocation7] sm:$0xff] %v164
      %s166 = scalar_lea.vmem [#allocation7], 8
      %v167 = vld [vmem:[%s166] sm:$0xff]
      %v168 = vadd.f32 %v167, %v160
      %169 = vst [vmem:[%s166] sm:$0xff] %v168
      %s170 = scalar_lea.vmem [#allocation7], 16
      %v171 = vld [vmem:[%s170] sm:$0xff]
      %v172 = vadd.f32 %v171, %v162
      %173 = vst [vmem:[%s170] sm:$0xff] %v172
    $region29: #{tpu_custom_call.1} parent=1 // pred_fallthru
      _
    // Predicated region
    $region30: #{tpu_custom_call.1} parent=1 // pred_check
      _
    $region31: #{tpu_custom_call.1} parent=1 // pred_check_branch
      %175 = sbr.rel (0) target = $region33
    $region32: #{tpu_custom_call.1} parent=1 // pred_region
      %s177 = ssub.s32 384, 384
      %178 = vsyncadd [#allocation4], %s177
      %s179 = sshll.u32 [#allocation7], 4
      %s180 = int_to_ptr.vmem [resolvable:$true] %s179
      %185 = dma.vmem_to_hbm [thread:$0]  %s180, 384, %s2, [#allocation4], 128, 128, 8
    $region33: #{tpu_custom_call.1} parent=1 // pred_fallthru
      _
    // Predicated region
    $region34: #{tpu_custom_call.1} parent=1 // pred_check
      _
    $region35: #{tpu_custom_call.1} parent=1 // pred_check_branch
      %187 = sbr.rel (0) target = $region37
    $region36: #{tpu_custom_call.1} parent=1 // pred_region
      %188 = dma.done [#allocation4], 384
    $region37: #{tpu_custom_call.1} parent=1 // pred_fallthru
      _
    %189 = vsyncpa [#allocation3], 1
    %190 = vsyncpa [#allocation6], 1
    %191 = vsyncpa [#allocation4], 1

</llo_original>
